<compile_context>
chip_gen: v7x
topology: tpu7x:2x2x1
jax: 0.10.0
libtpu: 0.0.40
codegen_flags: <defaults>
</compile_context>

<pallas_src>
import numpy as np
import jax
import jax.numpy as jnp
from jax.experimental import pallas as pl
from jax.experimental.pallas import tpu as pltpu

_INV_SQRT2 = 0.7071067811865476


def _adaptive_pool_matrix(n_in: int, n_out: int) -> jnp.ndarray:
    """Row-stochastic matrix implementing torch.nn.AdaptiveAvgPool along one axis."""
    m = np.zeros((n_out, n_in), dtype=np.float32)
    for i in range(n_out):
        s = (i * n_in) // n_out
        e = -((-(i + 1) * n_in) // n_out)  # ceil((i+1)*n_in / n_out)
        m[i, s:e] = 1.0 / (e - s)
    return jnp.asarray(m)


def _gate_kernel(x1_ref, w1t_ref, b1_ref, w2t_ref, b2_ref, gate_ref):
    # x1_ref  : (B, chw)        flattened x1, lane-dense (chw on lanes)
    # w1t_ref : (chw, hidden)   pool folded into 4x4 conv weight, transposed
    # b1_ref  : (1, hidden)
    # w2t_ref : (hidden, Cout)  1x1 conv weight, transposed
    # b2_ref  : (1, Cout)
    # gate_ref: (B, Cout)       sigmoid gate, emitted in x2.dtype
    h = jnp.dot(x1_ref[...], w1t_ref[...],
                preferred_element_type=jnp.float32) + b1_ref[...]      # (B, hidden)
    # exact (erf-based) GELU == torch.nn.GELU() default (approximate='none')
    h = 0.5 * h * (1.0 + jax.lax.erf(h * _INV_SQRT2))
    g = jnp.dot(h, w2t_ref[...],
                preferred_element_type=jnp.float32) + b2_ref[...]      # (B, Cout)
    gate = pl.reciprocal(1.0 + jnp.exp(-g))                            # exact sigmoid
    gate_ref[...] = gate.astype(gate_ref.dtype)


def _mul_kernel(gate_ref, x2_ref, o_ref):
    # gate_ref: (tr, 1)  in x2.dtype  -> lane broadcast against (tr, ts) tile (VPU)
    # x2_ref  : (tr, ts)
    # o_ref   : (tr, ts)
    o_ref[...] = x2_ref[...] * gate_ref[...]


def _largest_even_tile(dim: int, align: int, cap: int) -> int:
    """Largest multiple of `align` that divides `dim` and is <= cap (dim % align == 0).

    Returns `dim` itself when it already fits under the cap (no tiling needed).
    """
    if dim <= cap:
        return dim
    t = (cap // align) * align
    while t >= align:
        if dim % t == 0:
            return t
        t -= align
    return align


def _pick_tiles(rows: int, s2: int, itemsize: int):
    """Lane-dense tiles for the (rows, s2) broadcast multiply.

    ts: spatial (lane) tile — a multiple of 128 that divides s2 evenly (so the
        last block is never a masked partial store), capped at 2048 lanes.
    tr: row (sublane) tile — a multiple of 8 that divides rows evenly, sized so
        one x2/out tile stays ~<=2 MiB. With double buffering on x2 and out
        that is ~8 MiB of VMEM, comfortably inside v7x's 64 MiB (and the
        default 32 MiB scoped limit) as well as v5e/v6e.
    """
    ts = _largest_even_tile(s2, 128, 2048) if s2 % 128 == 0 else s2
    max_rows = max(8, (2 * 1024 * 1024) // (ts * itemsize))
    tr = _largest_even_tile(rows, 8, max_rows) if rows % 8 == 0 else rows
    return tr, ts


def skip_layer_excitation(x1, x2, w1, b1, w2, b2):
    """x1: (B, Cin, H1, W1), x2: (B, Cout, H2, W2)
    w1: (hidden, Cin, 4, 4), b1: (hidden,), w2: (Cout, hidden), b2: (Cout,)"""
    B, Cin, H1, W1 = x1.shape
    B2, Cout, H2, W2 = x2.shape
    assert B == B2
    hidden = w1.shape[0]
    chw = Cin * H1 * W1
    s2 = H2 * W2

    # --- glue: fold AdaptiveAvgPool2d(4) into the 4x4 conv weight (both linear) ---
    ph = _adaptive_pool_matrix(H1, 4)                                  # (4, H1)
    pw = _adaptive_pool_matrix(W1, 4)                                  # (4, W1)
    w_eff = jnp.einsum('ocij,ih,jw->ochw', w1, ph, pw)                 # (hidden, Cin, H1, W1)
    w1t = w_eff.reshape(hidden, chw).T.astype(jnp.float32)             # (chw, hidden)
    w2t = w2.T.astype(jnp.float32)                                     # (hidden, Cout)
    b1r = b1.reshape(1, hidden).astype(jnp.float32)
    b2r = b2.reshape(1, Cout).astype(jnp.float32)
    x1f = x1.reshape(B, chw).astype(jnp.float32)                       # lane-dense

    # --- kernel 1: batched gate for all B at once (tiny, one grid step) ---
    gate = pl.pallas_call(
        _gate_kernel,
        out_shape=jax.ShapeDtypeStruct((B, Cout), x2.dtype),
        grid_spec=pltpu.PrefetchScalarGridSpec(
            num_scalar_prefetch=0,
            grid=(1,),
            in_specs=[
                pl.BlockSpec((B, chw), lambda i: (0, 0)),
                pl.BlockSpec((chw, hidden), lambda i: (0, 0)),
                pl.BlockSpec((1, hidden), lambda i: (0, 0)),
                pl.BlockSpec((hidden, Cout), lambda i: (0, 0)),
                pl.BlockSpec((1, Cout), lambda i: (0, 0)),
            ],
            out_specs=pl.BlockSpec((B, Cout), lambda i: (0, 0)),
        ),
        compiler_params=pltpu.CompilerParams(dimension_semantics=("arbitrary",)),
    )(x1f, w1t, b1r, w2t, b2r)

    # --- kernel 2: lane-dense tiled, HBM-bound broadcast multiply ---
    rows = B * Cout
    x2f = x2.reshape(rows, s2)                                         # spatial on lanes
    gcol = gate.reshape(rows, 1)                                       # already x2.dtype
    itemsize = jnp.dtype(x2.dtype).itemsize
    tr, ts = _pick_tiles(rows, s2, itemsize)
    grid = (pl.cdiv(rows, tr), pl.cdiv(s2, ts))

    out = pl.pallas_call(
        _mul_kernel,
        out_shape=jax.ShapeDtypeStruct((rows, s2), x2.dtype),
        grid_spec=pltpu.PrefetchScalarGridSpec(
            num_scalar_prefetch=0,
            grid=grid,
            in_specs=[
                pl.BlockSpec((tr, 1), lambda r, s: (r, 0)),            # tiny gate column
                pl.BlockSpec((tr, ts), lambda r, s: (r, s)),           # x2 tile
            ],
            out_specs=pl.BlockSpec((tr, ts), lambda r, s: (r, s)),
        ),
        compiler_params=pltpu.CompilerParams(
            dimension_semantics=("parallel", "parallel"),
            vmem_limit_bytes=32 * 1024 * 1024,
        ),
    )(gcol, x2f)

    return out.reshape(B, Cout, H2, W2)


def _reference(x1, x2, w1, b1, w2, b2):
    """Pure-JAX reference matching the PyTorch module semantics."""
    _, _, H1, W1 = x1.shape
    ph = _adaptive_pool_matrix(H1, 4)
    pw = _adaptive_pool_matrix(W1, 4)
    pooled = jnp.einsum('ih,bchw,jw->bcij', ph, x1, pw)                # AdaptiveAvgPool2d(4)
    h = jnp.einsum('ocij,bcij->bo', w1, pooled) + b1                   # Conv2d(Cin,hidden,4)
    h = 0.5 * h * (1.0 + jax.lax.erf(h * _INV_SQRT2))                  # GELU (exact)
    g = jnp.einsum('oh,bh->bo', w2, h) + b2                            # Conv2d(hidden,Cout,1)
    gate = jax.nn.sigmoid(g)                                           # Sigmoid
    return x2 * gate[:, :, None, None]                                 # broadcast multiply


if __name__ == "__main__":
    B, Cin, hidden, Cout = 2, 4, 8, 8
    H1, W1 = 8, 8        # x1: low-res feature map fed to the excitation branch
    H2, W2 = 16, 16      # x2: feature map being gated

    key = jax.random.PRNGKey(0)
    k1, k2, k3, k4, k5, k6 = jax.random.split(key, 6)
    x1 = jax.random.normal(k1, (B, Cin, H1, W1), dtype=jnp.float32)
    x2 = jax.random.normal(k2, (B, Cout, H2, W2), dtype=jnp.float32)
    # deterministic parameter init (synthetic; shapes follow the torch module)
    w1 = 0.1 * jax.random.normal(k3, (hidden, Cin, 4, 4), dtype=jnp.float32)
    b1 = 0.1 * jax.random.normal(k4, (hidden,), dtype=jnp.float32)
    w2 = 0.1 * jax.random.normal(k5, (Cout, hidden), dtype=jnp.float32)  # 1x1 conv weight
    b2 = 0.1 * jax.random.normal(k6, (Cout,), dtype=jnp.float32)

    out = skip_layer_excitation(x1, x2, w1, b1, w2, b2)
    out = jax.block_until_ready(out)

    ref = _reference(x1, x2, w1, b1, w2, b2)
    assert out.shape == ref.shape == (B, Cout, H2, W2)
    np.testing.assert_allclose(np.asarray(out), np.asarray(ref), rtol=1e-4, atol=1e-4)

    print("KERNEL_OK")
</pallas_src>

<mosaic_0001>
module attributes {stable_mosaic.version = 11 : i64} {
  func.func @_gate_kernel(%arg0: i32, %arg1: memref<2x256xf32, #tpu.memory_space<vmem>>, %arg2: memref<256x8xf32, #tpu.memory_space<vmem>>, %arg3: memref<1x8xf32, #tpu.memory_space<vmem>>, %arg4: memref<8x8xf32, #tpu.memory_space<vmem>>, %arg5: memref<1x8xf32, #tpu.memory_space<vmem>>, %arg6: memref<2x8xf32, #tpu.memory_space<vmem>>) attributes {dimension_semantics = [#tpu.dimension_semantics<arbitrary>], iteration_bounds = array<i64: 1>, scalar_prefetch = 0 : i64, scratch_operands = 0 : i64, tpu.core_type = #tpu.core_type<tc>, window_params = [{pipeline_mode = #tpu.pipeline_mode<synchronous>, transform_indices = @transform_0, window_bounds = array<i64: 2, 256>}, {pipeline_mode = #tpu.pipeline_mode<synchronous>, transform_indices = @transform_1, window_bounds = array<i64: 256, 8>}, {pipeline_mode = #tpu.pipeline_mode<synchronous>, transform_indices = @transform_2, window_bounds = array<i64: 1, 8>}, {pipeline_mode = #tpu.pipeline_mode<synchronous>, transform_indices = @transform_3, window_bounds = array<i64: 8, 8>}, {pipeline_mode = #tpu.pipeline_mode<synchronous>, transform_indices = @transform_4, window_bounds = array<i64: 1, 8>}, {pipeline_mode = #tpu.pipeline_mode<synchronous>, transform_indices = @transform_5, window_bounds = array<i64: 2, 8>}]} {
    %c0 = arith.constant 0 : index
    %c0_0 = arith.constant 0 : index
    %0 = vector.load %arg1[%c0, %c0_0] : memref<2x256xf32, #tpu.memory_space<vmem>>, vector<2x256xf32>
    %c0_1 = arith.constant 0 : index
    %c0_2 = arith.constant 0 : index
    %1 = vector.load %arg2[%c0_1, %c0_2] : memref<256x8xf32, #tpu.memory_space<vmem>>, vector<256x8xf32>
    %cst = arith.constant dense<0.000000e+00> : vector<2x8xf32>
    %2 = tpu.matmul %0, %1, %cst {dimension_numbers = #tpu.dot_dimension_numbers<[1], [0], [0], [1], [0, 0, 1, 1], [], []>} : vector<2x256xf32>, vector<256x8xf32>, vector<2x8xf32> -> vector<2x8xf32>
    %c0_3 = arith.constant 0 : index
    %c0_4 = arith.constant 0 : index
    %3 = vector.load %arg3[%c0_3, %c0_4] : memref<1x8xf32, #tpu.memory_space<vmem>>, vector<1x8xf32>
    %4 = vector.broadcast %3 : vector<1x8xf32> to vector<2x8xf32>
    %5 = arith.addf %2, %4 : vector<2x8xf32>
    %cst_5 = arith.constant 5.000000e-01 : f32
    %6 = vector.broadcast %cst_5 : f32 to vector<2x8xf32>
    %7 = arith.mulf %6, %5 : vector<2x8xf32>
    %cst_6 = arith.constant 0.707106769 : f32
    %8 = vector.broadcast %cst_6 : f32 to vector<2x8xf32>
    %9 = arith.mulf %5, %8 : vector<2x8xf32>
    %10 = math.erf %9 : vector<2x8xf32>
    %cst_7 = arith.constant 1.000000e+00 : f32
    %11 = vector.broadcast %cst_7 : f32 to vector<2x8xf32>
    %12 = arith.addf %11, %10 : vector<2x8xf32>
    %13 = arith.mulf %7, %12 : vector<2x8xf32>
    %c0_8 = arith.constant 0 : index
    %c0_9 = arith.constant 0 : index
    %14 = vector.load %arg4[%c0_8, %c0_9] : memref<8x8xf32, #tpu.memory_space<vmem>>, vector<8x8xf32>
    %cst_10 = arith.constant dense<0.000000e+00> : vector<2x8xf32>
    %15 = tpu.matmul %13, %14, %cst_10 {dimension_numbers = #tpu.dot_dimension_numbers<[1], [0], [0], [1], [0, 0, 1, 1], [], []>} : vector<2x8xf32>, vector<8x8xf32>, vector<2x8xf32> -> vector<2x8xf32>
    %c0_11 = arith.constant 0 : index
    %c0_12 = arith.constant 0 : index
    %16 = vector.load %arg5[%c0_11, %c0_12] : memref<1x8xf32, #tpu.memory_space<vmem>>, vector<1x8xf32>
    %17 = vector.broadcast %16 : vector<1x8xf32> to vector<2x8xf32>
    %18 = arith.addf %15, %17 : vector<2x8xf32>
    %cst_13 = arith.constant 0.000000e+00 : f32
    %19 = vector.broadcast %cst_13 : f32 to vector<2x8xf32>
    %20 = arith.subf %19, %18 : vector<2x8xf32>
    %21 = math.exp %20 : vector<2x8xf32>
    %cst_14 = arith.constant 1.000000e+00 : f32
    %22 = vector.broadcast %cst_14 : f32 to vector<2x8xf32>
    %23 = arith.addf %22, %21 : vector<2x8xf32>
    %24 = tpu.reciprocal %23 : vector<2x8xf32> -> vector<2x8xf32>
    %c0_15 = arith.constant 0 : index
    %c0_16 = arith.constant 0 : index
    %25 = vector.load %arg6[%c0_15, %c0_16] : memref<2x8xf32, #tpu.memory_space<vmem>>, vector<2x8xf32>
    tpu.vector_store %arg6[%c0_15, %c0_16], %24 {strides = array<i32>} : memref<2x8xf32, #tpu.memory_space<vmem>>, vector<2x8xf32>,
    return
  }
  func.func @transform_0(%arg0: i32) -> (i32, i32) {
    %c0_i32 = arith.constant 0 : i32
    %c0_i32_0 = arith.constant 0 : i32
    %c0_i32_1 = arith.constant 0 : i32
    return %c0_i32, %c0_i32_0 : i32, i32
  }
  func.func @transform_1(%arg0: i32) -> (i32, i32) {
    %c0_i32 = arith.constant 0 : i32
    %c0_i32_0 = arith.constant 0 : i32
    %c0_i32_1 = arith.constant 0 : i32
    return %c0_i32, %c0_i32_0 : i32, i32
  }
  func.func @transform_2(%arg0: i32) -> (i32, i32) {
    %c0_i32 = arith.constant 0 : i32
    %c0_i32_0 = arith.constant 0 : i32
    %c0_i32_1 = arith.constant 0 : i32
    return %c0_i32, %c0_i32_0 : i32, i32
  }
  func.func @transform_3(%arg0: i32) -> (i32, i32) {
    %c0_i32 = arith.constant 0 : i32
    %c0_i32_0 = arith.constant 0 : i32
    %c0_i32_1 = arith.constant 0 : i32
    return %c0_i32, %c0_i32_0 : i32, i32
  }
  func.func @transform_4(%arg0: i32) -> (i32, i32) {
    %c0_i32 = arith.constant 0 : i32
    %c0_i32_0 = arith.constant 0 : i32
    %c0_i32_1 = arith.constant 0 : i32
    return %c0_i32, %c0_i32_0 : i32, i32
  }
  func.func @transform_5(%arg0: i32) -> (i32, i32) {
    %c0_i32 = arith.constant 0 : i32
    %c0_i32_0 = arith.constant 0 : i32
    %c0_i32_1 = arith.constant 0 : i32
    return %c0_i32, %c0_i32_0 : i32, i32
  }
}

</mosaic_0001>

<llo_original>
// kernel: tpu_custom_call.1
$region0: #{tpu_custom_call.1}
  #allocation0 [shape = 'u32[]', space=smem, size = 0x4, offset = 0x4, fixed_abs, tag = 'smem constant byte address 0x4 - core index']
  #allocation1 [shape = 'u32[144,128]{1,0:T(1,128)}', space=vmem, size = 0x12000, scoped, tag = 'internal scratch']
  %s0 = inlined_call_operand.vmem [shape: f32[2,256], index: 0, kind: input, shape index: {}]
  %s1 = inlined_call_operand.vmem [shape: f32[256,8], index: 1, kind: input, shape index: {}]
  %s2 = inlined_call_operand.vmem [shape: f32[1,8], index: 2, kind: input, shape index: {}]
  %s3 = inlined_call_operand.vmem [shape: f32[8,8], index: 3, kind: input, shape index: {}]
  %s4 = inlined_call_operand.vmem [shape: f32[1,8], index: 4, kind: input, shape index: {}]
  %s5 = inlined_call_operand.hbm [shape: f32[2,8], index: 5, kind: output, shape index: {}]
  %s6 = sld [smem:[#allocation0]]
  $region30: #{tpu_custom_call.1} parent=0
    _
  %s8 = ssub.s32 1, %s6
  %s9 = scalar_select 0, %s8, %s6
  $region1: #{tpu_custom_call.1} parent=0
    #allocation2 [shape = 'u8[1024]{0}', space=vmem, size = 0x400, scoped, tag = 'output window, operand 0, single buffered']
    #allocation3 [shape = 's32[1]{0}', space=sflag, size = 0x4, scoped, tag = 'scoped memory for tpu_custom_call.1']
    %10 = vsyncpa [#allocation3], 0
    // Predicated region
    $region2: #{tpu_custom_call.1} parent=1 // pred_check
      _
    $region3: #{tpu_custom_call.1} parent=1 // pred_check_branch
      %12 = sbr.rel (0) target = $region5
    $region4: #{tpu_custom_call.1} parent=1 // pred_region
      _
    $region5: #{tpu_custom_call.1} parent=1 // pred_fallthru
      _
    // Predicated region
    $region6: #{tpu_custom_call.1} parent=1 // pred_check
      _
    $region7: #{tpu_custom_call.1} parent=1 // pred_check_branch
      %14 = sbr.rel (0) target = $region9
    $region8: #{tpu_custom_call.1} parent=1 // pred_region
      _
    $region9: #{tpu_custom_call.1} parent=1 // pred_fallthru
      _
    // Predicated region
    $region10: #{tpu_custom_call.1} parent=1 // pred_check
      _
    $region11: #{tpu_custom_call.1} parent=1 // pred_check_branch
      %16 = sbr.rel (0) target = $region13
    $region12: #{tpu_custom_call.1} parent=1 // pred_region
      _
    $region13: #{tpu_custom_call.1} parent=1 // pred_fallthru
      _
    // Predicated region
    $region14: #{tpu_custom_call.1} parent=1 // pred_check
      _
    $region15: #{tpu_custom_call.1} parent=1 // pred_check_branch
      %18 = sbr.rel (0) target = $region17
    $region16: #{tpu_custom_call.1} parent=1 // pred_region
      _
    $region17: #{tpu_custom_call.1} parent=1 // pred_fallthru
      _
    // Predicated region
    $region18: #{tpu_custom_call.1} parent=1 // pred_check
      _
    $region19: #{tpu_custom_call.1} parent=1 // pred_check_branch
      %20 = sbr.rel (0) target = $region21
    $region20: #{tpu_custom_call.1} parent=1 // pred_region
      _
    $region21: #{tpu_custom_call.1} parent=1 // pred_fallthru
      _
    %v21 = vld [vmem:[%s0] sm:$0xf]
    %v22 = vld [vmem:[%s1] sm:$0xff]
    %v23 = vld [vmem:[%s1 + $0x8] sm:$0xff]
    %v24 = vld [vmem:[%s1 + $0x10] sm:$0xff]
    %v25 = vld [vmem:[%s1 + $0x18] sm:$0xff]
    %v26 = vld [vmem:[%s1 + $0x20] sm:$0xff]
    %v27 = vld [vmem:[%s1 + $0x28] sm:$0xff]
    %v28 = vld [vmem:[%s1 + $0x30] sm:$0xff]
    %v29 = vld [vmem:[%s1 + $0x38] sm:$0xff]
    %v30 = vld [vmem:[%s1 + $0x40] sm:$0xff]
    %v31 = vld [vmem:[%s1 + $0x48] sm:$0xff]
    %v32 = vld [vmem:[%s1 + $0x50] sm:$0xff]
    %v33 = vld [vmem:[%s1 + $0x58] sm:$0xff]
    %v34 = vld [vmem:[%s1 + $0x60] sm:$0xff]
    %v35 = vld [vmem:[%s1 + $0x68] sm:$0xff]
    %v36 = vld [vmem:[%s1 + $0x70] sm:$0xff]
    %v37 = vld [vmem:[%s1 + $0x78] sm:$0xff]
    %v38 = vld [vmem:[%s1 + $0x80] sm:$0xff]
    %v39 = vld [vmem:[%s1 + $0x88] sm:$0xff]
    %v40 = vld [vmem:[%s1 + $0x90] sm:$0xff]
    %v41 = vld [vmem:[%s1 + $0x98] sm:$0xff]
    %v42 = vld [vmem:[%s1 + $0xa0] sm:$0xff]
    %v43 = vld [vmem:[%s1 + $0xa8] sm:$0xff]
    %v44 = vld [vmem:[%s1 + $0xb0] sm:$0xff]
    %v45 = vld [vmem:[%s1 + $0xb8] sm:$0xff]
    %v46 = vld [vmem:[%s1 + $0xc0] sm:$0xff]
    %v47 = vld [vmem:[%s1 + $0xc8] sm:$0xff]
    %v48 = vld [vmem:[%s1 + $0xd0] sm:$0xff]
    %v49 = vld [vmem:[%s1 + $0xd8] sm:$0xff]
    %v50 = vld [vmem:[%s1 + $0xe0] sm:$0xff]
    %v51 = vld [vmem:[%s1 + $0xe8] sm:$0xff]
    %v52 = vld [vmem:[%s1 + $0xf0] sm:$0xff]
    %v53 = vld [vmem:[%s1 + $0xf8] sm:$0xff]
    %v54 = vld [vmem:[%s2] sm:$0x1]
    %v56 = vlaneseq
    %v57 = vshrl.u32 %v56, 7
    %v58 = vsub.s32 0, %v57
    %v59 = vrot.slane %v54, %v58
    %v63 = vunpack.c.l.s4 1983009808
    %v64 = vunpack.c.0.s8 %v63
    %v65 = vlaneseq
    %v66 = vshrl.u32 %v65, 7
    %v67 = vsub.s32 %v64, %v66
    %v68 = vrot.slane %v21, %v67
    %v69 = vcombine.high %v68, %v68
    %72 = vmatprep.subr.mxu0 0.0
    %73 = vmatpush1.msra.mxu0 %v22
    %74 = vmatprep.subr.mxu0 0.0
    %75 = vmatpush1.msra.mxu0 %v23
    %76 = vmatprep.subr.mxu0 0.0
    %77 = vmatpush1.msra.mxu0 %v24
    %78 = vmatprep.subr.mxu0 0.0
    %79 = vmatpush1.msra.mxu0 %v25
    %80 = vmatprep.subr.mxu0 0.0
    %81 = vmatpush1.msra.mxu0 %v26
    %82 = vmatprep.subr.mxu0 0.0
    %83 = vmatpush1.msra.mxu0 %v27
    %84 = vmatprep.subr.mxu0 0.0
    %85 = vmatpush1.msra.mxu0 %v28
    %86 = vmatprep.subr.mxu0 0.0
    %87 = vmatpush1.msra.mxu0 %v29
    %88 = vmatprep.subr.mxu0 0.0
    %89 = vmatpush1.msra.mxu0 %v30
    %90 = vmatprep.subr.mxu0 0.0
    %91 = vmatpush1.msra.mxu0 %v31
    %92 = vmatprep.subr.mxu0 0.0
    %93 = vmatpush1.msra.mxu0 %v32
    %94 = vmatprep.subr.mxu0 0.0
    %95 = vmatpush1.msra.mxu0 %v33
    %96 = vmatprep.subr.mxu0 0.0
    %97 = vmatpush1.msra.mxu0 %v34
    %98 = vmatprep.subr.mxu0 0.0
    %99 = vmatpush1.msra.mxu0 %v35
    %100 = vmatprep.subr.mxu0 0.0
    %101 = vmatpush1.msra.mxu0 %v36
    %102 = vmatprep.subr.mxu0 0.0
    %103 = vmatpush1.msra.mxu0 %v37
    %104 = vmatprep.subr.mxu0 0.0
    %105 = vmatpush1.msra.mxu0 %v38
    %106 = vmatprep.subr.mxu0 0.0
    %107 = vmatpush1.msra.mxu0 %v39
    %108 = vmatprep.subr.mxu0 0.0
    %109 = vmatpush1.msra.mxu0 %v40
    %110 = vmatprep.subr.mxu0 0.0
    %111 = vmatpush1.msra.mxu0 %v41
    %112 = vmatprep.subr.mxu0 0.0
    %113 = vmatpush1.msra.mxu0 %v42
    %114 = vmatprep.subr.mxu0 0.0
    %115 = vmatpush1.msra.mxu0 %v43
    %116 = vmatprep.subr.mxu0 0.0
    %117 = vmatpush1.msra.mxu0 %v44
    %118 = vmatprep.subr.mxu0 0.0
    %119 = vmatpush1.msra.mxu0 %v45
    %120 = vmatprep.subr.mxu0 0.0
    %121 = vmatpush1.msra.mxu0 %v46
    %122 = vmatprep.subr.mxu0 0.0
    %123 = vmatpush1.msra.mxu0 %v47
    %124 = vmatprep.subr.mxu0 0.0
    %125 = vmatpush1.msra.mxu0 %v48
    %126 = vmatprep.subr.mxu0 0.0
    %127 = vmatpush1.msra.mxu0 %v49
    %128 = vmatprep.subr.mxu0 0.0
    %129 = vmatpush1.msra.mxu0 %v50
    %130 = vmatprep.subr.mxu0 0.0
    %131 = vmatpush1.msra.mxu0 %v51
    %132 = vmatprep.subr.mxu0 0.0
    %133 = vmatpush1.msra.mxu0 %v52
    %134 = vmatprep.subr.mxu0 0.0
    %135 = vmatpush1.msra.mxu0 %v53
    %136 = vmatprep.mubr.f32.mxu0 %v69
    %137 = vmatmul.mubr.f32.gmra.mrb[0].mxu0 %v68
    %v138 = vpop.f32.mrb[0].mxu0
    %v139 = vadd.f32 %v59, %v138
    %v140 = vpop.f32.mrb[0].mxu0
    %141 = vdwg.mxu0
    %v142 = vmul.f32 %v139, 0.5
    %v143 = vmul.f32 %v139, 0.70710677
    %v144 = verf.f32.pop %v143
    %v145 = vadd.f32 %v144, 1.0
    %v146 = vmul.f32 %v142, %v145
    %v147 = vld [vmem:[%s3] sm:$0xff]
    %v148 = vld [vmem:[%s4] sm:$0x1]
    %v150 = vlaneseq
    %v151 = vshrl.u32 %v150, 7
    %v152 = vsub.s32 0, %v151
    %v153 = vrot.slane %v148, %v152
    %vm155 = vcmask 64512
    %v157 = vsel %vm155, %v146, 0
    %159 = vmatprep.subr.mxu0 0.0
    %160 = vmatpush1.msra.mxu0 %v147
    %161 = vmatprep.subr.mxu0 0.0
    %162 = vmatpush1.msra.mxu0 0.0
    %163 = vmatprep.subr.mxu0 0.0
    %164 = vmatpush1.msra.mxu0 0.0
    %165 = vmatprep.subr.mxu0 0.0
    %166 = vmatpush1.msra.mxu0 0.0
    %167 = vmatprep.subr.mxu0 0.0
    %168 = vmatpush1.msra.mxu0 0.0
    %169 = vmatprep.subr.mxu0 0.0
    %170 = vmatpush1.msra.mxu0 0.0
    %171 = vmatprep.subr.mxu0 0.0
    %172 = vmatpush1.msra.mxu0 0.0
    %173 = vmatprep.subr.mxu0 0.0
    %174 = vmatpush1.msra.mxu0 0.0
    %175 = vmatprep.subr.mxu0 0.0
    %176 = vmatpush1.msra.mxu0 0.0
    %177 = vmatprep.subr.mxu0 0.0
    %178 = vmatpush1.msra.mxu0 0.0
    %179 = vmatprep.subr.mxu0 0.0
    %180 = vmatpush1.msra.mxu0 0.0
    %181 = vmatprep.subr.mxu0 0.0
    %182 = vmatpush1.msra.mxu0 0.0
    %183 = vmatprep.subr.mxu0 0.0
    %184 = vmatpush1.msra.mxu0 0.0
    %185 = vmatprep.subr.mxu0 0.0
    %186 = vmatpush1.msra.mxu0 0.0
    %187 = vmatprep.subr.mxu0 0.0
    %188 = vmatpush1.msra.mxu0 0.0
    %189 = vmatprep.subr.mxu0 0.0
    %190 = vmatpush1.msra.mxu0 0.0
    %191 = vmatprep.subr.mxu0 0.0
    %192 = vmatpush1.msra.mxu0 0.0
    %193 = vmatprep.subr.mxu0 0.0
    %194 = vmatpush1.msra.mxu0 0.0
    %195 = vmatprep.subr.mxu0 0.0
    %196 = vmatpush1.msra.mxu0 0.0
    %197 = vmatprep.subr.mxu0 0.0
    %198 = vmatpush1.msra.mxu0 0.0
    %199 = vmatprep.subr.mxu0 0.0
    %200 = vmatpush1.msra.mxu0 0.0
    %201 = vmatprep.subr.mxu0 0.0
    %202 = vmatpush1.msra.mxu0 0.0
    %203 = vmatprep.subr.mxu0 0.0
    %204 = vmatpush1.msra.mxu0 0.0
    %205 = vmatprep.subr.mxu0 0.0
    %206 = vmatpush1.msra.mxu0 0.0
    %207 = vmatprep.subr.mxu0 0.0
    %208 = vmatpush1.msra.mxu0 0.0
    %209 = vmatprep.subr.mxu0 0.0
    %210 = vmatpush1.msra.mxu0 0.0
    %211 = vmatprep.subr.mxu0 0.0
    %212 = vmatpush1.msra.mxu0 0.0
    %213 = vmatprep.subr.mxu0 0.0
    %214 = vmatpush1.msra.mxu0 0.0
    %215 = vmatprep.subr.mxu0 0.0
    %216 = vmatpush1.msra.mxu0 0.0
    %217 = vmatprep.subr.mxu0 0.0
    %218 = vmatpush1.msra.mxu0 0.0
    %219 = vmatprep.subr.mxu0 0.0
    %220 = vmatpush1.msra.mxu0 0.0
    %221 = vmatprep.subr.mxu0 0.0
    %222 = vmatpush1.msra.mxu0 0.0
    %223 = vmatprep.mubr.f32.mxu0 0.0
    %224 = vmatmul.mubr.f32.gmra.mrb[0].mxu0 %v157
    %v225 = vpop.f32.mrb[0].mxu0
    %v226 = vadd.f32 %v153, %v225
    %v227 = vpop.f32.mrb[0].mxu0
    %228 = vdwg.mxu0
    %v229 = vsub.f32 0.0, %v226
    %v230 = vmul.f32 %v229, 1.442695
    %v231 = vpow.pop %v230
    %v232 = vadd.f32 %v231, 1.0
    %v233 = vrcp.pop %v232
    %vm234 = vcmask 58368
    %235 = vst.msk [vmem:[#allocation2] sm:$0x3] %vm234, %v233
    // Predicated region
    $region22: #{tpu_custom_call.1} parent=1 // pred_check
      _
    $region23: #{tpu_custom_call.1} parent=1 // pred_check_branch
      %237 = sbr.rel (0) target = $region25
    $region24: #{tpu_custom_call.1} parent=1 // pred_region
      %s239 = ssub.s32 32, 32
      %240 = vsyncadd [#allocation3], %s239
      %s242 = sshll.u32 [#allocation2], 4
      %s243 = int_to_ptr.vmem [resolvable:$true] %s242
      %245 = dma.vmem_to_hbm [thread:$0]  %s243, 32, %s5, [#allocation3]
    $region25: #{tpu_custom_call.1} parent=1 // pred_fallthru
      _
    // Predicated region
    $region26: #{tpu_custom_call.1} parent=1 // pred_check
      _
    $region27: #{tpu_custom_call.1} parent=1 // pred_check_branch
      %247 = sbr.rel (0) target = $region29
    $region28: #{tpu_custom_call.1} parent=1 // pred_region
      %248 = dma.done [#allocation3], 32
    $region29: #{tpu_custom_call.1} parent=1 // pred_fallthru
      _
    %249 = vsyncpa [#allocation3], 1

</llo_original>
